<compile_context>
chip_gen: v5e
topology: v5e:2x2
jax: 0.10.0
libtpu: 0.0.40
codegen_flags: <defaults>
</compile_context>

<pallas_src>
import jax
import jax.numpy as jnp
from jax import lax
from jax.experimental import pallas as pl
from jax.experimental.pallas import tpu as pltpu


# --------------------------------------------------------------------------
# Kernels
# --------------------------------------------------------------------------
def _make_loss_kernel(binarize: bool):
    def kernel(pred_ref, tgt_ref, mask_ref, out_ref):
        Bt, C, H, W = pred_ref.shape
        f32 = jnp.float32

        # Blocks stay in their input dtype; upcast lazily inside expressions.
        p = pred_ref[...]                       # (Bt, C, H, W)
        t = tgt_ref[...]                        # (Bt, C, H, W)
        m = mask_ref[...].astype(f32)           # (Bt, 1, H, W)
        if binarize:
            m = (m > 0.5).astype(f32)

        # ------------------- factored MSE sums (vectorized) -----------------
        diff = p.astype(f32) - t.astype(f32)
        d2c = jnp.sum(diff * diff, axis=1, keepdims=True)   # (Bt, 1, H, W)
        if binarize:
            # binary mask: m^2 == m and (1-m)^2 == 1-m, so the unmasked SSE is
            # recovered in the wrapper as total - masked.
            sum_masked = jnp.sum(d2c * m)                    # masked SSE
            sum_other = jnp.sum(d2c)                         # total SSE
        else:
            # fractional mask (channel-mean path): use the squared weights.
            sum_masked = jnp.sum(d2c * (m * m))                          # masked SSE
            sum_other = jnp.sum(d2c * ((1.0 - m) * (1.0 - m)))           # unmasked SSE

        # --------- boundary terms: lane-aligned rolls + iota edge masks ------
        col = lax.broadcasted_iota(jnp.int32, (H, W), 1)
        row = lax.broadcasted_iota(jnp.int32, (H, W), 0)
        edge_x = (col < (W - 1)).astype(f32)    # zero-padded column w == W-1
        edge_y = (row > 0).astype(f32)          # zero-padded row    h == 0

        def gx(x):   # |x[..., h, w+1] - x[..., h, w]| ; wrap column masked by edge_x
            return jnp.abs(pltpu.roll(x, shift=W - 1, axis=x.ndim - 1) - x)

        def gy(x):   # |x[..., h, w] - x[..., h-1, w]| ; wrap row masked by edge_y
            return jnp.abs(x - pltpu.roll(x, shift=1, axis=x.ndim - 2))

        bm = jnp.clip(gx(m) * edge_x + gy(m) * edge_y, 0.0, 1.0)   # (Bt,1,H,W)
        sum_bm = jnp.sum(bm)

        pf = p.astype(f32)
        tf = t.astype(f32)
        dx = gx(pf) - gx(tf)                                   # (Bt, C, H, W)
        dy = gy(pf) - gy(tf)
        sx = jnp.sum(dx * dx, axis=1, keepdims=True)           # (Bt, 1, H, W)
        sy = jnp.sum(dy * dy, axis=1, keepdims=True)
        bm2 = bm * bm
        # edge masks also zero the garbage wrap column / row of dx / dy.
        sum_bxy = jnp.sum(sx * (bm2 * edge_x) + sy * (bm2 * edge_y))

        # ---- pack the four partial sums into one lane-dense (8,128) block ----
        rows8 = lax.broadcasted_iota(jnp.int32, (8, 128), 0)
        out_ref[0] = (jnp.where(rows8 == 0, sum_masked, 0.0)
                      + jnp.where(rows8 == 1, sum_other, 0.0)
                      + jnp.where(rows8 == 2, sum_bxy, 0.0)
                      + jnp.where(rows8 == 3, sum_bm, 0.0))

    return kernel


def _mse_kernel(pred_ref, tgt_ref, out_ref):
    """mask=None fast path: plain SSE, no boundary/gradient work at all."""
    diff = pred_ref[...].astype(jnp.float32) - tgt_ref[...].astype(jnp.float32)
    s = jnp.sum(diff * diff)
    rows8 = lax.broadcasted_iota(jnp.int32, (8, 128), 0)
    out_ref[0] = jnp.where(rows8 == 0, s, 0.0)


# --------------------------------------------------------------------------
# Block sizing (generation-aware)
# --------------------------------------------------------------------------
def _vmem_capacity_bytes():
    try:
        return int(pltpu.get_tpu_info().vmem_capacity_bytes)
    except Exception:
        return 64 * 1024 * 1024   # conservative (v7x-sized) fallback


def _pick_block_batches(B, C, H, W, in_itemsize, mask_itemsize, vmem_cap, vmem_limit):
    """Largest divisor of B (capped at B//2 for 2-TC sharding) fitting the budget."""
    per_batch_in = C * H * W * in_itemsize        # one input array, one batch
    per_batch_mask = H * W * mask_itemsize
    per_batch_f32 = C * H * W * 4                 # f32 temporaries scale with this
    # Generation-aware per-array input budget per grid step:
    #   128 MiB VMEM (v5e/v6e) -> ~5.3 MiB/array, 64 MiB (v7x) -> ~2.7 MiB/array.
    per_array_budget = max(1, vmem_cap // 24)
    # Keep >= 2 grid steps when possible so the "parallel" batch axis can shard
    # across both TensorCores on dual-core chips (v7x); 1-TC chips unaffected.
    bt_cap = max(1, B // 2)
    best = 1
    for d in range(1, B + 1):
        if B % d != 0 or d > bt_cap:
            continue
        in_bytes = d * per_batch_in
        # double-buffered pred+tgt+mask blocks + ~8x f32 temporaries + output
        est = (2 * (2 * in_bytes + d * per_batch_mask)
               + 8 * d * per_batch_f32 + 2 * 8 * 128 * 4)
        if in_bytes <= per_array_budget and est <= int(0.85 * vmem_limit):
            best = d
    return best


# --------------------------------------------------------------------------
# Wrapper
# --------------------------------------------------------------------------
def inpainting_loss(model_output, target, mask=None,
                    mask_weight: float = 2.0, boundary_weight: float = 1.5):
    B, C, H, W = model_output.shape
    n = float(B * C * H * W)   # F.mse_loss(reduction='mean') denominator

    in_itemsize = jnp.dtype(model_output.dtype).itemsize
    vmem_cap = _vmem_capacity_bytes()
    # Raise the scoped VMEM limit with headroom; respects the 64 MiB v7x ceiling.
    vmem_limit = min(int(vmem_cap * 0.70), 100 * 1024 * 1024)

    if mask is None:
        # Dedicated MSE-only kernel: skips all boundary/gradient work.
        Bt = _pick_block_batches(B, C, H, W, in_itemsize, 0, vmem_cap, vmem_limit)
        G = B // Bt
        parts = pl.pallas_call(
            _mse_kernel,
            out_shape=jax.ShapeDtypeStruct((G, 8, 128), jnp.float32),
            grid_spec=pltpu.PrefetchScalarGridSpec(
                num_scalar_prefetch=0,
                grid=(G,),
                in_specs=[
                    pl.BlockSpec((Bt, C, H, W), lambda g: (g, 0, 0, 0)),
                    pl.BlockSpec((Bt, C, H, W), lambda g: (g, 0, 0, 0)),
                ],
                out_specs=pl.BlockSpec((1, 8, 128), lambda g: (g, 0, 0)),
            ),
            compiler_params=pltpu.CompilerParams(
                dimension_semantics=("parallel",),
                vmem_limit_bytes=vmem_limit,
            ),
            cost_estimate=pl.CostEstimate(
                flops=int(3 * B * C * H * W),
                transcendentals=0,
                bytes_accessed=int(2 * model_output.size * in_itemsize
                                   + G * 8 * 128 * 4),
            ),
        )(model_output, target)
        mse = jnp.sum(parts[:, 0, 0]) / n
        return {'loss': mse, 'masked_loss': mse, 'unmasked_loss': mse}

    if mask.shape[1] != 1:
        # Glue: binarize then channel-mean (may be fractional -> no re-threshold).
        mask_in = jnp.mean((mask > 0.5).astype(jnp.float32), axis=1, keepdims=True)
        binarize = False
    else:
        mask_in = mask                      # kernel casts + thresholds in place
        binarize = True

    mask_itemsize = jnp.dtype(mask_in.dtype).itemsize
    Bt = _pick_block_batches(B, C, H, W, in_itemsize, mask_itemsize,
                             vmem_cap, vmem_limit)
    G = B // Bt

    bytes_accessed = int(model_output.size * in_itemsize
                         + target.size * jnp.dtype(target.dtype).itemsize
                         + mask_in.size * mask_itemsize
                         + G * 8 * 128 * 4)

    parts = pl.pallas_call(
        _make_loss_kernel(binarize),
        out_shape=jax.ShapeDtypeStruct((G, 8, 128), jnp.float32),
        grid_spec=pltpu.PrefetchScalarGridSpec(
            num_scalar_prefetch=0,
            grid=(G,),
            in_specs=[
                pl.BlockSpec((Bt, C, H, W), lambda g: (g, 0, 0, 0)),
                pl.BlockSpec((Bt, C, H, W), lambda g: (g, 0, 0, 0)),
                pl.BlockSpec((Bt, 1, H, W), lambda g: (g, 0, 0, 0)),
            ],
            out_specs=pl.BlockSpec((1, 8, 128), lambda g: (g, 0, 0)),
        ),
        compiler_params=pltpu.CompilerParams(
            dimension_semantics=("parallel",),
            vmem_limit_bytes=vmem_limit,
        ),
        cost_estimate=pl.CostEstimate(
            flops=int(20 * B * C * H * W),
            transcendentals=0,
            bytes_accessed=bytes_accessed,
        ),
    )(model_output, target, mask_in)

    sm = jnp.sum(parts[:, 0, 0])     # masked SSE
    s2 = jnp.sum(parts[:, 1, 0])     # total SSE (binarize) or unmasked SSE
    sbxy = jnp.sum(parts[:, 2, 0])   # boundary-x + boundary-y SSE
    bsum = jnp.sum(parts[:, 3, 0])   # boundary-mask sum

    mse_masked = sm / n
    su = (s2 - sm) if binarize else s2
    mse_unmasked = su / n

    # Exact == 0.0 compare is safe: every contribution to bsum is non-negative f32.
    boundary_loss = jnp.where(bsum == 0.0, jnp.float32(0.0), sbxy / n * 0.5)
    masked_loss = mse_masked * mask_weight
    unmasked_loss = mse_unmasked
    total = masked_loss + unmasked_loss + boundary_loss * boundary_weight
    return {'loss': total, 'masked_loss': masked_loss,
            'unmasked_loss': unmasked_loss, 'boundary_loss': boundary_loss}


# ----------------------- pure-JAX reference (for checking) -----------------------
def _reference_loss(pred, tgt, mask, mask_weight=2.0, boundary_weight=1.5):
    m = (mask > 0.5).astype(jnp.float32)
    if m.shape[1] != 1:
        m = m.mean(axis=1, keepdims=True)

    masked = jnp.mean((pred * m - tgt * m) ** 2) * mask_weight
    unmasked = jnp.mean((pred * (1.0 - m) - tgt * (1.0 - m)) ** 2)

    def gx(x):
        g = jnp.abs(x[:, :, :, 1:] - x[:, :, :, :-1])
        return jnp.pad(g, ((0, 0), (0, 0), (0, 0), (0, 1)))

    def gy(x):  # intended H-axis top padding
        g = jnp.abs(x[:, :, 1:, :] - x[:, :, :-1, :])
        return jnp.pad(g, ((0, 0), (0, 0), (1, 0), (0, 0)))

    bm = jnp.clip(gx(m) + gy(m), 0.0, 1.0)
    blx = jnp.mean((gx(pred) * bm - gx(tgt) * bm) ** 2)
    bly = jnp.mean((gy(pred) * bm - gy(tgt) * bm) ** 2)
    boundary = jnp.where(bm.sum() == 0.0, 0.0, (blx + bly) / 2.0)
    total = masked + unmasked + boundary * boundary_weight
    return {'loss': total, 'masked_loss': masked,
            'unmasked_loss': unmasked, 'boundary_loss': boundary}


if __name__ == "__main__":
    key = jax.random.PRNGKey(0)
    k1, k2, k3 = jax.random.split(key, 3)

    B, C, H, W = 2, 4, 16, 16
    model_output = jax.random.normal(k1, (B, C, H, W), jnp.float32)
    target = jax.random.normal(k2, (B, C, H, W), jnp.float32)
    # Continuous mask in [0, 1]; the kernel applies the (> 0.5) binarization.
    mask = jax.random.uniform(k3, (B, 1, H, W), jnp.float32)

    out = inpainting_loss(model_output, target, mask)
    out = jax.block_until_ready(out)
    ref = _reference_loss(model_output, target, mask)
    for name in ref:
        a = float(out[name])
        b = float(ref[name])
        assert abs(a - b) <= 1e-4 * max(1.0, abs(b)), (name, a, b)

    # mask=None path (plain MSE) uses the dedicated MSE-only kernel.
    out_none = jax.block_until_ready(inpainting_loss(model_output, target, None))
    ref_mse = float(jnp.mean((model_output - target) ** 2))
    for name in ('loss', 'masked_loss', 'unmasked_loss'):
        a = float(out_none[name])
        assert abs(a - ref_mse) <= 1e-4 * max(1.0, abs(ref_mse)), (name, a, ref_mse)

    print("KERNEL_OK")
</pallas_src>

<mosaic_0001>
module attributes {stable_mosaic.version = 11 : i64} {
  func.func @kernel(%arg0: i32, %arg1: memref<1x4x16x16xf32, #tpu.memory_space<vmem>>, %arg2: memref<1x4x16x16xf32, #tpu.memory_space<vmem>>, %arg3: memref<1x1x16x16xf32, #tpu.memory_space<vmem>>, %arg4: memref<1x8x128xf32, #tpu.memory_space<vmem>>) attributes {dimension_semantics = [#tpu.dimension_semantics<parallel>], iteration_bounds = array<i64: 2>, scalar_prefetch = 0 : i64, scratch_operands = 0 : i64, tpu.core_type = #tpu.core_type<tc>, window_params = [{transform_indices = @transform_0, window_bounds = array<i64: 1, 4, 16, 16>}, {transform_indices = @transform_1, window_bounds = array<i64: 1, 4, 16, 16>}, {transform_indices = @transform_2, window_bounds = array<i64: 1, 1, 16, 16>}, {transform_indices = @transform_3, window_bounds = array<i64: 1, 8, 128>}]} {
    %c0 = arith.constant 0 : index
    %c0_0 = arith.constant 0 : index
    %c0_1 = arith.constant 0 : index
    %c0_2 = arith.constant 0 : index
    %0 = vector.load %arg1[%c0, %c0_0, %c0_1, %c0_2] : memref<1x4x16x16xf32, #tpu.memory_space<vmem>>, vector<1x4x16x16xf32>
    %c0_3 = arith.constant 0 : index
    %c0_4 = arith.constant 0 : index
    %c0_5 = arith.constant 0 : index
    %c0_6 = arith.constant 0 : index
    %1 = vector.load %arg2[%c0_3, %c0_4, %c0_5, %c0_6] : memref<1x4x16x16xf32, #tpu.memory_space<vmem>>, vector<1x4x16x16xf32>
    %c0_7 = arith.constant 0 : index
    %c0_8 = arith.constant 0 : index
    %c0_9 = arith.constant 0 : index
    %c0_10 = arith.constant 0 : index
    %2 = vector.load %arg3[%c0_7, %c0_8, %c0_9, %c0_10] : memref<1x1x16x16xf32, #tpu.memory_space<vmem>>, vector<1x1x16x16xf32>
    %cst = arith.constant 5.000000e-01 : f32
    %3 = vector.broadcast %cst : f32 to vector<1x1x16x16xf32>
    %4 = arith.cmpf ogt, %2, %3 : vector<1x1x16x16xf32>
    %5 = arith.extui %4 : vector<1x1x16x16xi1> to vector<1x1x16x16xi32>
    %6 = arith.sitofp %5 : vector<1x1x16x16xi32> to vector<1x1x16x16xf32>
    %7 = arith.subf %0, %1 : vector<1x4x16x16xf32>
    %8 = arith.mulf %7, %7 : vector<1x4x16x16xf32>
    %cst_11 = arith.constant dense<0.000000e+00> : vector<1x16x16xf32>
    %9 = vector.multi_reduction <add>, %8, %cst_11 [1] : vector<1x4x16x16xf32> to vector<1x16x16xf32>
    %10 = vector.shape_cast %9 : vector<1x16x16xf32> to vector<1x1x16x16xf32>
    %11 = arith.mulf %10, %6 : vector<1x1x16x16xf32>
    %12 = vector.shape_cast %11 : vector<1x1x16x16xf32> to vector<1x1x1x16x16xf32>
    %cst_12 = arith.constant dense<0.000000e+00> : vector<1xf32>
    %13 = vector.multi_reduction <add>, %12, %cst_12 [1, 2, 3, 4] : vector<1x1x1x16x16xf32> to vector<1xf32>
    %14 = vector.shape_cast %13 : vector<1xf32> to vector<1x1x1x1x1xf32>
    %15 = vector.extract %14[0, 0, 0, 0, 0] : f32 from vector<1x1x1x1x1xf32>
    %16 = vector.shape_cast %10 : vector<1x1x16x16xf32> to vector<1x1x1x16x16xf32>
    %cst_13 = arith.constant dense<0.000000e+00> : vector<1xf32>
    %17 = vector.multi_reduction <add>, %16, %cst_13 [1, 2, 3, 4] : vector<1x1x1x16x16xf32> to vector<1xf32>
    %18 = vector.shape_cast %17 : vector<1xf32> to vector<1x1x1x1x1xf32>
    %19 = vector.extract %18[0, 0, 0, 0, 0] : f32 from vector<1x1x1x1x1xf32>
    %20 = tpu.iota {dimensions = array<i32: 1>} : vector<16x16xi32>
    %21 = tpu.iota {dimensions = array<i32: 0>} : vector<16x16xi32>
    %c15_i32 = arith.constant 15 : i32
    %22 = vector.broadcast %c15_i32 : i32 to vector<16x16xi32>
    %23 = arith.cmpi slt, %20, %22 : vector<16x16xi32>
    %24 = arith.extui %23 : vector<16x16xi1> to vector<16x16xi32>
    %25 = arith.sitofp %24 : vector<16x16xi32> to vector<16x16xf32>
    %c0_i32 = arith.constant 0 : i32
    %26 = vector.broadcast %c0_i32 : i32 to vector<16x16xi32>
    %27 = arith.cmpi sgt, %21, %26 : vector<16x16xi32>
    %28 = arith.extui %27 : vector<16x16xi1> to vector<16x16xi32>
    %29 = arith.sitofp %28 : vector<16x16xi32> to vector<16x16xf32>
    %c15_i32_14 = arith.constant 15 : i32
    %30 = tpu.dynamic_rotate %6 by %c15_i32_14 dim 3 : vector<1x1x16x16xf32>, i32 -> vector<1x1x16x16xf32>
    %31 = arith.subf %30, %6 : vector<1x1x16x16xf32>
    %32 = math.absf %31 : vector<1x1x16x16xf32>
    %33 = vector.shape_cast %25 : vector<16x16xf32> to vector<1x1x16x16xf32>
    %34 = arith.mulf %32, %33 : vector<1x1x16x16xf32>
    %c1_i32 = arith.constant 1 : i32
    %35 = tpu.dynamic_rotate %6 by %c1_i32 dim 2 : vector<1x1x16x16xf32>, i32 -> vector<1x1x16x16xf32>
    %36 = arith.subf %6, %35 : vector<1x1x16x16xf32>
    %37 = math.absf %36 : vector<1x1x16x16xf32>
    %38 = vector.shape_cast %29 : vector<16x16xf32> to vector<1x1x16x16xf32>
    %39 = arith.mulf %37, %38 : vector<1x1x16x16xf32>
    %40 = arith.addf %34, %39 : vector<1x1x16x16xf32>
    %cst_15 = arith.constant 0.000000e+00 : f32
    %cst_16 = arith.constant 1.000000e+00 : f32
    %41 = vector.broadcast %cst_15 : f32 to vector<1x1x16x16xf32>
    %42 = arith.maximumf %41, %40 : vector<1x1x16x16xf32>
    %43 = vector.broadcast %cst_16 : f32 to vector<1x1x16x16xf32>
    %44 = arith.minimumf %43, %42 : vector<1x1x16x16xf32>
    %45 = vector.shape_cast %44 : vector<1x1x16x16xf32> to vector<1x1x1x16x16xf32>
    %cst_17 = arith.constant dense<0.000000e+00> : vector<1xf32>
    %46 = vector.multi_reduction <add>, %45, %cst_17 [1, 2, 3, 4] : vector<1x1x1x16x16xf32> to vector<1xf32>
    %47 = vector.shape_cast %46 : vector<1xf32> to vector<1x1x1x1x1xf32>
    %48 = vector.extract %47[0, 0, 0, 0, 0] : f32 from vector<1x1x1x1x1xf32>
    %c15_i32_18 = arith.constant 15 : i32
    %49 = tpu.dynamic_rotate %0 by %c15_i32_18 dim 3 : vector<1x4x16x16xf32>, i32 -> vector<1x4x16x16xf32>
    %50 = arith.subf %49, %0 : vector<1x4x16x16xf32>
    %51 = math.absf %50 : vector<1x4x16x16xf32>
    %c15_i32_19 = arith.constant 15 : i32
    %52 = tpu.dynamic_rotate %1 by %c15_i32_19 dim 3 : vector<1x4x16x16xf32>, i32 -> vector<1x4x16x16xf32>
    %53 = arith.subf %52, %1 : vector<1x4x16x16xf32>
    %54 = math.absf %53 : vector<1x4x16x16xf32>
    %55 = arith.subf %51, %54 : vector<1x4x16x16xf32>
    %c1_i32_20 = arith.constant 1 : i32
    %56 = tpu.dynamic_rotate %0 by %c1_i32_20 dim 2 : vector<1x4x16x16xf32>, i32 -> vector<1x4x16x16xf32>
    %57 = arith.subf %0, %56 : vector<1x4x16x16xf32>
    %58 = math.absf %57 : vector<1x4x16x16xf32>
    %c1_i32_21 = arith.constant 1 : i32
    %59 = tpu.dynamic_rotate %1 by %c1_i32_21 dim 2 : vector<1x4x16x16xf32>, i32 -> vector<1x4x16x16xf32>
    %60 = arith.subf %1, %59 : vector<1x4x16x16xf32>
    %61 = math.absf %60 : vector<1x4x16x16xf32>
    %62 = arith.subf %58, %61 : vector<1x4x16x16xf32>
    %63 = arith.mulf %55, %55 : vector<1x4x16x16xf32>
    %cst_22 = arith.constant dense<0.000000e+00> : vector<1x16x16xf32>
    %64 = vector.multi_reduction <add>, %63, %cst_22 [1] : vector<1x4x16x16xf32> to vector<1x16x16xf32>
    %65 = vector.shape_cast %64 : vector<1x16x16xf32> to vector<1x1x16x16xf32>
    %66 = arith.mulf %62, %62 : vector<1x4x16x16xf32>
    %cst_23 = arith.constant dense<0.000000e+00> : vector<1x16x16xf32>
    %67 = vector.multi_reduction <add>, %66, %cst_23 [1] : vector<1x4x16x16xf32> to vector<1x16x16xf32>
    %68 = vector.shape_cast %67 : vector<1x16x16xf32> to vector<1x1x16x16xf32>
    %69 = arith.mulf %44, %44 : vector<1x1x16x16xf32>
    %70 = vector.shape_cast %25 : vector<16x16xf32> to vector<1x1x16x16xf32>
    %71 = arith.mulf %69, %70 : vector<1x1x16x16xf32>
    %72 = arith.mulf %65, %71 : vector<1x1x16x16xf32>
    %73 = vector.shape_cast %29 : vector<16x16xf32> to vector<1x1x16x16xf32>
    %74 = arith.mulf %69, %73 : vector<1x1x16x16xf32>
    %75 = arith.mulf %68, %74 : vector<1x1x16x16xf32>
    %76 = arith.addf %72, %75 : vector<1x1x16x16xf32>
    %77 = vector.shape_cast %76 : vector<1x1x16x16xf32> to vector<1x1x1x16x16xf32>
    %cst_24 = arith.constant dense<0.000000e+00> : vector<1xf32>
    %78 = vector.multi_reduction <add>, %77, %cst_24 [1, 2, 3, 4] : vector<1x1x1x16x16xf32> to vector<1xf32>
    %79 = vector.shape_cast %78 : vector<1xf32> to vector<1x1x1x1x1xf32>
    %80 = vector.extract %79[0, 0, 0, 0, 0] : f32 from vector<1x1x1x1x1xf32>
    %81 = tpu.iota {dimensions = array<i32: 0>} : vector<8x128xi32>
    %c0_i32_25 = arith.constant 0 : i32
    %82 = vector.broadcast %c0_i32_25 : i32 to vector<8x128xi32>
    %83 = arith.cmpi eq, %81, %82 : vector<8x128xi32>
    %cst_26 = arith.constant 0.000000e+00 : f32
    %84 = vector.broadcast %15 : f32 to vector<8x128xf32>
    %85 = vector.broadcast %cst_26 : f32 to vector<8x128xf32>
    %86 = arith.select %83, %84, %85 : vector<8x128xi1>, vector<8x128xf32>
    %c1_i32_27 = arith.constant 1 : i32
    %87 = vector.broadcast %c1_i32_27 : i32 to vector<8x128xi32>
    %88 = arith.cmpi eq, %81, %87 : vector<8x128xi32>
    %cst_28 = arith.constant 0.000000e+00 : f32
    %89 = vector.broadcast %19 : f32 to vector<8x128xf32>
    %90 = vector.broadcast %cst_28 : f32 to vector<8x128xf32>
    %91 = arith.select %88, %89, %90 : vector<8x128xi1>, vector<8x128xf32>
    %92 = arith.addf %86, %91 : vector<8x128xf32>
    %c2_i32 = arith.constant 2 : i32
    %93 = vector.broadcast %c2_i32 : i32 to vector<8x128xi32>
    %94 = arith.cmpi eq, %81, %93 : vector<8x128xi32>
    %cst_29 = arith.constant 0.000000e+00 : f32
    %95 = vector.broadcast %80 : f32 to vector<8x128xf32>
    %96 = vector.broadcast %cst_29 : f32 to vector<8x128xf32>
    %97 = arith.select %94, %95, %96 : vector<8x128xi1>, vector<8x128xf32>
    %98 = arith.addf %92, %97 : vector<8x128xf32>
    %c3_i32 = arith.constant 3 : i32
    %99 = vector.broadcast %c3_i32 : i32 to vector<8x128xi32>
    %100 = arith.cmpi eq, %81, %99 : vector<8x128xi32>
    %cst_30 = arith.constant 0.000000e+00 : f32
    %101 = vector.broadcast %48 : f32 to vector<8x128xf32>
    %102 = vector.broadcast %cst_30 : f32 to vector<8x128xf32>
    %103 = arith.select %100, %101, %102 : vector<8x128xi1>, vector<8x128xf32>
    %104 = arith.addf %98, %103 : vector<8x128xf32>
    %c0_31 = arith.constant 0 : index
    %c0_32 = arith.constant 0 : index
    %c0_33 = arith.constant 0 : index
    %105 = vector.load %arg4[%c0_31, %c0_32, %c0_33] : memref<1x8x128xf32, #tpu.memory_space<vmem>>, vector<1x8x128xf32>
    %106 = vector.shape_cast %105 : vector<1x8x128xf32> to vector<8x128xf32>
    %107 = vector.shape_cast %104 : vector<8x128xf32> to vector<1x8x128xf32>
    tpu.vector_store %arg4[%c0_31, %c0_32, %c0_33], %107 {strides = array<i32>} : memref<1x8x128xf32, #tpu.memory_space<vmem>>, vector<1x8x128xf32>,
    return
  }
  func.func @transform_0(%arg0: i32) -> (i32, i32, i32, i32) {
    %c0_i32 = arith.constant 0 : i32
    %c0_i32_0 = arith.constant 0 : i32
    %c0_i32_1 = arith.constant 0 : i32
    %c0_i32_2 = arith.constant 0 : i32
    return %arg0, %c0_i32, %c0_i32_0, %c0_i32_1 : i32, i32, i32, i32
  }
  func.func @transform_1(%arg0: i32) -> (i32, i32, i32, i32) {
    %c0_i32 = arith.constant 0 : i32
    %c0_i32_0 = arith.constant 0 : i32
    %c0_i32_1 = arith.constant 0 : i32
    %c0_i32_2 = arith.constant 0 : i32
    return %arg0, %c0_i32, %c0_i32_0, %c0_i32_1 : i32, i32, i32, i32
  }
  func.func @transform_2(%arg0: i32) -> (i32, i32, i32, i32) {
    %c0_i32 = arith.constant 0 : i32
    %c0_i32_0 = arith.constant 0 : i32
    %c0_i32_1 = arith.constant 0 : i32
    %c0_i32_2 = arith.constant 0 : i32
    return %arg0, %c0_i32, %c0_i32_0, %c0_i32_1 : i32, i32, i32, i32
  }
  func.func @transform_3(%arg0: i32) -> (i32, i32, i32) {
    %c0_i32 = arith.constant 0 : i32
    %c0_i32_0 = arith.constant 0 : i32
    %c0_i32_1 = arith.constant 0 : i32
    return %arg0, %c0_i32, %c0_i32_0 : i32, i32, i32
  }
}

</mosaic_0001>

<llo_original>
// kernel: tpu_custom_call.1
$region0: #{tpu_custom_call.1}
  #allocation0 [shape = 'u32[]', space=smem, size = 0x4, offset = 0x4, fixed_abs, tag = 'smem constant byte address 0x4 - core index']
  #allocation1 [shape = 'u32[72,128]{1,0:T(1,128)}', space=vmem, size = 0x9000, scoped, tag = 'internal scratch']
  %s0 = inlined_call_operand.hbm [shape: f32[2,4,16,16], index: 0, kind: input, shape index: {}]
  %s1 = inlined_call_operand.hbm [shape: f32[2,4,16,16], index: 1, kind: input, shape index: {}]
  %s2 = inlined_call_operand.hbm [shape: f32[2,1,16,16], index: 2, kind: input, shape index: {}]
  %s3 = inlined_call_operand.hbm [shape: f32[2,8,128], index: 3, kind: output, shape index: {}]
  %s4 = sld [smem:[#allocation0]]
  $region57: #{tpu_custom_call.1} parent=0
    _
  %s6 = ssub.s32 1, %s4
  %s7 = scalar_select 0, %s6, %s4
  $region1: #{tpu_custom_call.1} parent=0
    #allocation2 [shape = 'u8[65536]{0}', space=vmem, size = 0x10000, scoped, tag = 'input window, operand 0']
    #allocation3 [shape = 's32[2]{0}', space=sflag, size = 0x8, scoped, tag = 'scoped memory for tpu_custom_call.1']
    #allocation4 [shape = 's32[2]{0}', space=sflag, size = 0x8, scoped, tag = 'scoped memory for tpu_custom_call.1']
    #allocation5 [shape = 'u8[65536]{0}', space=vmem, size = 0x10000, scoped, tag = 'input window, operand 1']
    #allocation6 [shape = 's32[2]{0}', space=sflag, size = 0x8, scoped, tag = 'scoped memory for tpu_custom_call.1']
    #allocation7 [shape = 'u8[16384]{0}', space=vmem, size = 0x4000, scoped, tag = 'input window, operand 2']
    #allocation8 [shape = 'u8[8192]{0}', space=vmem, size = 0x2000, scoped, tag = 'output window, operand 0']
    %8 = vsyncpa [#allocation3], 0
    %s9 = scalar_lea.sflag [#allocation3], 1
    %10 = vsyncpa %s9, 0
    %11 = vsyncpa [#allocation6], 0
    %s12 = scalar_lea.sflag [#allocation6], 1
    %13 = vsyncpa %s12, 0
    %14 = vsyncpa [#allocation4], 0
    %s15 = scalar_lea.sflag [#allocation4], 1
    %16 = vsyncpa %s15, 0
    loop: start=0, step=1, limit=4
    $region2: #{tpu_custom_call.1} parent=1 // loop_pre_header
      _
    $region3: #{tpu_custom_call.1} parent=1 // loop_header
      %s18 = sphi 0, %s22
      %p19 = scmp.ge.s32.totalorder %s18, 4
      %s28 = sphi 0, %s30
      %s31 = sphi 0, %s28
      %s32 = sphi 0, %s31
      %s48 = sphi 0, %s32
      %s54 = sphi 0, %s56
      %s57 = sphi 0, %s54
      %s58 = sphi 0, %s57
      %s74 = sphi 0, %s58
      %s80 = sphi 0, %s82
      %s83 = sphi 0, %s80
      %s84 = sphi 0, %s83
      %s100 = sphi 0, %s84
      %s106 = sphi 0, %s108
      %s109 = sphi 0, %s106
      %s110 = sphi 0, %s109
      %s126 = sphi 0, %s110
    $region4: #{tpu_custom_call.1} parent=1 // loop_header_branch
      %21 = sbr.rel (%p19) target = $region8
    $region5: #{tpu_custom_call.1} parent=1 // loop_body
      %s23 = ssub.s32 %s18, 1
      %s24 = ssub.s32 %s18, 2
      %s25 = sadd.s32 %s18, 1
      %s26 = ssub.s32 %s18, %s25
      %p27 = scmp.eq.s32.totalorder %s26, 0
      %s29 = sadd.s32 %s28, 1
      %s30 = scalar_select %p27, %s28, %s29
      %p33 = pneg %p27
      %p34 = scmp.eq.s32.totalorder %s18, 1
      %p35 = por %p33, %p34
      %p36 = scmp.ne.s32.totalorder %s28, %s31
      %p37 = scmp.eq.s32.totalorder %s18, 0
      %p38 = por %p36, %p37
      %p39 = scmp.ne.s32.totalorder %s28, %s31
      %p40 = scmp.eq.s32.totalorder %s23, 1
      %p41 = por %p39, %p40
      %p42 = scmp.ne.s32.totalorder %s31, %s32
      %p43 = scmp.eq.s32.totalorder %s23, 0
      %p44 = por %p42, %p43
      %p45 = scmp.ne.s32.totalorder %s31, %s32
      %p46 = scmp.eq.s32.totalorder %s24, 1
      %p47 = por %p45, %p46
      %p49 = scmp.ne.s32.totalorder %s32, %s48
      %p50 = scmp.eq.s32.totalorder %s24, 0
      %p51 = por %p49, %p50
      %s52 = ssub.s32 %s18, %s25
      %p53 = scmp.eq.s32.totalorder %s52, 0
      %s55 = sadd.s32 %s54, 1
      %s56 = scalar_select %p53, %s54, %s55
      %p59 = pneg %p53
      %p60 = scmp.eq.s32.totalorder %s18, 1
      %p61 = por %p59, %p60
      %p62 = scmp.ne.s32.totalorder %s54, %s57
      %p63 = scmp.eq.s32.totalorder %s18, 0
      %p64 = por %p62, %p63
      %p65 = scmp.ne.s32.totalorder %s54, %s57
      %p66 = scmp.eq.s32.totalorder %s23, 1
      %p67 = por %p65, %p66
      %p68 = scmp.ne.s32.totalorder %s57, %s58
      %p69 = scmp.eq.s32.totalorder %s23, 0
      %p70 = por %p68, %p69
      %p71 = scmp.ne.s32.totalorder %s57, %s58
      %p72 = scmp.eq.s32.totalorder %s24, 1
      %p73 = por %p71, %p72
      %p75 = scmp.ne.s32.totalorder %s58, %s74
      %p76 = scmp.eq.s32.totalorder %s24, 0
      %p77 = por %p75, %p76
      %s78 = ssub.s32 %s18, %s25
      %p79 = scmp.eq.s32.totalorder %s78, 0
      %s81 = sadd.s32 %s80, 1
      %s82 = scalar_select %p79, %s80, %s81
      %p85 = pneg %p79
      %p86 = scmp.eq.s32.totalorder %s18, 1
      %p87 = por %p85, %p86
      %p88 = scmp.ne.s32.totalorder %s80, %s83
      %p89 = scmp.eq.s32.totalorder %s18, 0
      %p90 = por %p88, %p89
      %p91 = scmp.ne.s32.totalorder %s80, %s83
      %p92 = scmp.eq.s32.totalorder %s23, 1
      %p93 = por %p91, %p92
      %p94 = scmp.ne.s32.totalorder %s83, %s84
      %p95 = scmp.eq.s32.totalorder %s23, 0
      %p96 = por %p94, %p95
      %p97 = scmp.ne.s32.totalorder %s83, %s84
      %p98 = scmp.eq.s32.totalorder %s24, 1
      %p99 = por %p97, %p98
      %p101 = scmp.ne.s32.totalorder %s84, %s100
      %p102 = scmp.eq.s32.totalorder %s24, 0
      %p103 = por %p101, %p102
      %s104 = ssub.s32 %s18, %s25
      %p105 = scmp.eq.s32.totalorder %s104, 0
      %s107 = sadd.s32 %s106, 1
      %s108 = scalar_select %p105, %s106, %s107
      %p111 = pneg %p105
      %p112 = scmp.eq.s32.totalorder %s18, 1
      %p113 = por %p111, %p112
      %p114 = scmp.ne.s32.totalorder %s106, %s109
      %p115 = scmp.eq.s32.totalorder %s18, 0
      %p116 = por %p114, %p115
      %p117 = scmp.ne.s32.totalorder %s106, %s109
      %p118 = scmp.eq.s32.totalorder %s23, 1
      %p119 = por %p117, %p118
      %p120 = scmp.ne.s32.totalorder %s109, %s110
      %p121 = scmp.eq.s32.totalorder %s23, 0
      %p122 = por %p120, %p121
      %p123 = scmp.ne.s32.totalorder %s109, %s110
      %p124 = scmp.eq.s32.totalorder %s24, 1
      %p125 = por %p123, %p124
      %p127 = scmp.ne.s32.totalorder %s110, %s126
      %p128 = scmp.eq.s32.totalorder %s24, 0
      %p129 = por %p127, %p128
      %p130 = scmp.le.s32.totalorder 1, %s18
      %p131 = scmp.lt.s32.totalorder %s18, 3
      %p132 = pnand %p130, %p131
      %p133 = pneg %p132
      // Predicated region
      $region9: #{tpu_custom_call.1} parent=5 // pred_check
        _
      $region10: #{tpu_custom_call.1} parent=5 // pred_check_branch
        %135 = sbr.rel (%p132) target = $region12
      $region11: #{tpu_custom_call.1} parent=5 // pred_region
        %s136 = ssub.s32 %s18, 1
      $region12: #{tpu_custom_call.1} parent=5 // pred_fallthru
        _
      %p137 = scmp.lt.s32.totalorder %s18, 2
      // Predicated region
      $region13: #{tpu_custom_call.1} parent=5 // pred_check
        %p138 = pneg %p137
      $region14: #{tpu_custom_call.1} parent=5 // pred_check_branch
        %140 = sbr.rel (%p138) target = $region16
      $region15: #{tpu_custom_call.1} parent=5 // pred_region
        // Predicated region
        $region17: #{tpu_custom_call.1} parent=15 // pred_check
          %p141 = pneg %p38
        $region18: #{tpu_custom_call.1} parent=15 // pred_check_branch
          %143 = sbr.rel (%p141) target = $region20
        $region19: #{tpu_custom_call.1} parent=15 // pred_region
          %s144 = sand.u32 %s28, 1
          %s145 = scalar_lea.sflag [#allocation3], %s144
          %s146 = sand.u32 %s28, 1
          %s147 = smul.addr %s146, 64
          %s148 = scalar_lea.vmem [#allocation2], %s147
          %150 = vsyncadd %s145, 0
          %s151 = smul.addr %s18, 8
          %s152 = smul.addr %s151, 8
          %s153 = scalar_lea.hbm %s0, %s152
          %s154 = sshll.u32 %s153, 4
          %s155 = int_to_ptr.hbm [resolvable:$true] %s154
          %s156 = sshll.u32 %s148, 4
          %s157 = int_to_ptr.vmem [resolvable:$true] %s156
          %162 = dma.hbm_to_vmem [thread:$0]  %s155, 1024, %s157, %s145, 128, 128, 8
        $region20: #{tpu_custom_call.1} parent=15 // pred_fallthru
          _
        // Predicated region
        $region21: #{tpu_custom_call.1} parent=15 // pred_check
          %p163 = pneg %p64
        $region22: #{tpu_custom_call.1} parent=15 // pred_check_branch
          %165 = sbr.rel (%p163) target = $region24
        $region23: #{tpu_custom_call.1} parent=15 // pred_region
          %s166 = sand.u32 %s18, 1
          %s167 = scalar_lea.sflag [#allocation6], %s166
          %s168 = sand.u32 %s54, 1
          %s169 = smul.addr %s168, 64
          %s170 = scalar_lea.vmem [#allocation5], %s169
          %172 = vsyncadd %s167, 0
          %s173 = smul.addr %s18, 8
          %s174 = smul.addr %s173, 8
          %s175 = scalar_lea.hbm %s1, %s174
          %s176 = sshll.u32 %s175, 4
          %s177 = int_to_ptr.hbm [resolvable:$true] %s176
          %s178 = sshll.u32 %s170, 4
          %s179 = int_to_ptr.vmem [resolvable:$true] %s178
          %184 = dma.hbm_to_vmem [thread:$0]  %s177, 1024, %s179, %s167, 128, 128, 8
        $region24: #{tpu_custom_call.1} parent=15 // pred_fallthru
          _
        // Predicated region
        $region25: #{tpu_custom_call.1} parent=15 // pred_check
          %p185 = pneg %p90
        $region26: #{tpu_custom_call.1} parent=15 // pred_check_branch
          %187 = sbr.rel (%p185) target = $region28
        $region27: #{tpu_custom_call.1} parent=15 // pred_region
          %s188 = sand.u32 %s18, 1
          %s189 = scalar_lea.sflag [#allocation6], %s188
          %s190 = sand.u32 %s80, 1
          %s191 = smul.addr %s190, 16
          %s192 = scalar_lea.vmem [#allocation7], %s191
          %194 = vsyncadd %s189, 0
          %s195 = smul.addr %s18, 2
          %s196 = smul.addr %s195, 8
          %s197 = scalar_lea.hbm %s2, %s196
          %s198 = sshll.u32 %s197, 4
          %s199 = int_to_ptr.hbm [resolvable:$true] %s198
          %s200 = sshll.u32 %s192, 4
          %s201 = int_to_ptr.vmem [resolvable:$true] %s200
          %206 = dma.hbm_to_vmem [thread:$0]  %s199, 256, %s201, %s189, 128, 128, 8
        $region28: #{tpu_custom_call.1} parent=15 // pred_fallthru
          _
      $region16: #{tpu_custom_call.1} parent=5 // pred_fallthru
        _
      %p207 = scmp.le.s32.totalorder 1, %s18
      %p208 = scmp.lt.s32.totalorder %s18, 3
      %p209 = pnand %p207, %p208
      %p210 = pneg %p209
      // Predicated region
      $region29: #{tpu_custom_call.1} parent=5 // pred_check
        _
      $region30: #{tpu_custom_call.1} parent=5 // pred_check_branch
        %212 = sbr.rel (%p209) target = $region32
      $region31: #{tpu_custom_call.1} parent=5 // pred_region
        %s213 = ssub.s32 %s18, 1
        %s214 = sand.u32 %s31, 1
        %s215 = scalar_lea.sflag [#allocation3], %s214
        %s216 = sand.u32 %s31, 1
        %s217 = smul.addr %s216, 64
        %s218 = scalar_lea.vmem [#allocation2], %s217
        // Predicated region
        $region33: #{tpu_custom_call.1} parent=31 // pred_check
          %p219 = pneg %p44
        $region34: #{tpu_custom_call.1} parent=31 // pred_check_branch
          %221 = sbr.rel (%p219) target = $region36
        $region35: #{tpu_custom_call.1} parent=31 // pred_region
          %223 = dma.done %s215, 1024
        $region36: #{tpu_custom_call.1} parent=31 // pred_fallthru
          _
        %s224 = sand.u32 %s23, 1
        %s225 = scalar_lea.sflag [#allocation6], %s224
        %s226 = sand.u32 %s57, 1
        %s227 = smul.addr %s226, 64
        %s228 = scalar_lea.vmem [#allocation5], %s227
        // Predicated region
        $region37: #{tpu_custom_call.1} parent=31 // pred_check
          %p229 = pneg %p70
        $region38: #{tpu_custom_call.1} parent=31 // pred_check_branch
          %231 = sbr.rel (%p229) target = $region40
        $region39: #{tpu_custom_call.1} parent=31 // pred_region
          %233 = dma.done %s225, 1024
        $region40: #{tpu_custom_call.1} parent=31 // pred_fallthru
          _
        %s234 = sand.u32 %s23, 1
        %s235 = scalar_lea.sflag [#allocation6], %s234
        %s236 = sand.u32 %s83, 1
        %s237 = smul.addr %s236, 16
        %s238 = scalar_lea.vmem [#allocation7], %s237
        // Predicated region
        $region41: #{tpu_custom_call.1} parent=31 // pred_check
          %p239 = pneg %p96
        $region42: #{tpu_custom_call.1} parent=31 // pred_check_branch
          %241 = sbr.rel (%p239) target = $region44
        $region43: #{tpu_custom_call.1} parent=31 // pred_region
          %243 = dma.done %s235, 256
        $region44: #{tpu_custom_call.1} parent=31 // pred_fallthru
          _
        %s244 = sand.u32 %s31, 1
        %s245 = scalar_lea.sflag [#allocation3], %s244
        %s246 = sand.u32 %s31, 1
        %s247 = smul.addr %s246, 64
        %s248 = scalar_lea.vmem [#allocation2], %s247
        %p249 = pneg %p44
        %p250 = pneg %p41
        %s251 = sand.u32 %s23, 1
        %s252 = scalar_lea.sflag [#allocation6], %s251
        %s253 = sand.u32 %s57, 1
        %s254 = smul.addr %s253, 64
        %s255 = scalar_lea.vmem [#allocation5], %s254
        %p256 = pneg %p70
        %p257 = pneg %p67
        %s258 = sand.u32 %s23, 1
        %s259 = scalar_lea.sflag [#allocation6], %s258
        %s260 = sand.u32 %s83, 1
        %s261 = smul.addr %s260, 16
        %s262 = scalar_lea.vmem [#allocation7], %s261
        %p263 = pneg %p96
        %p264 = pneg %p93
        %p265 = pneg %p122
        %p266 = pneg %p119
        %s267 = sand.u32 %s109, 1
        %s268 = scalar_lea.sflag [#allocation4], %s267
        %s269 = sand.u32 %s109, 1
        %s270 = smul.addr %s269, 8
        %s271 = scalar_lea.vmem [#allocation8], %s270
        %v272 = vld [vmem:[%s218] sm:$0xff]
        %v273 = vld [vmem:[%s218 + $0x8] sm:$0xff]
        %v274 = vld [vmem:[%s218 + $0x10] sm:$0xff]
        %v275 = vld [vmem:[%s218 + $0x18] sm:$0xff]
        %v276 = vld [vmem:[%s218 + $0x20] sm:$0xff]
        %v277 = vld [vmem:[%s218 + $0x28] sm:$0xff]
        %v278 = vld [vmem:[%s218 + $0x30] sm:$0xff]
        %v279 = vld [vmem:[%s218 + $0x38] sm:$0xff]
        %v280 = vld [vmem:[%s228] sm:$0xff]
        %v281 = vld [vmem:[%s228 + $0x8] sm:$0xff]
        %v282 = vld [vmem:[%s228 + $0x10] sm:$0xff]
        %v283 = vld [vmem:[%s228 + $0x18] sm:$0xff]
        %v284 = vld [vmem:[%s228 + $0x20] sm:$0xff]
        %v285 = vld [vmem:[%s228 + $0x28] sm:$0xff]
        %v286 = vld [vmem:[%s228 + $0x30] sm:$0xff]
        %v287 = vld [vmem:[%s228 + $0x38] sm:$0xff]
        %v288 = vld [vmem:[%s238] sm:$0xff]
        %v289 = vld [vmem:[%s238 + $0x8] sm:$0xff]
        %vm290 = vcmp.gt.f32.partialorder %v288, 0.5
        %vm291 = vcmp.gt.f32.partialorder %v289, 0.5
        %v292 = vsel %vm290, 1, 0
        %v293 = vsel %vm291, 1, 0
        %v294 = vcvt.s32.f32 %v292
        %v295 = vcvt.s32.f32 %v293
        %v296 = vsub.f32 %v272, %v280
        %v297 = vsub.f32 %v273, %v281
        %v298 = vsub.f32 %v274, %v282
        %v299 = vsub.f32 %v275, %v283
        %v300 = vsub.f32 %v276, %v284
        %v301 = vsub.f32 %v277, %v285
        %v302 = vsub.f32 %v278, %v286
        %v303 = vsub.f32 %v279, %v287
        %v304 = vmul.f32 %v296, %v296
        %v305 = vmul.f32 %v297, %v297
        %v306 = vmul.f32 %v298, %v298
        %v307 = vmul.f32 %v299, %v299
        %v308 = vmul.f32 %v300, %v300
        %v309 = vmul.f32 %v301, %v301
        %v310 = vmul.f32 %v302, %v302
        %v311 = vmul.f32 %v303, %v303
        %vm312 = vcmask 130048
        %v313 = vsel %vm312, %v304, 0.0
        %v314 = vsel %vm312, %v306, 0.0
        %v315 = vadd.f32 %v313, %v314
        %v316 = vsel %vm312, %v308, 0.0
        %v317 = vadd.f32 %v315, %v316
        %v318 = vsel %vm312, %v310, 0.0
        %v319 = vadd.f32 %v317, %v318
        %v320 = vsel %vm312, %v305, 0.0
        %v321 = vsel %vm312, %v307, 0.0
        %v322 = vadd.f32 %v320, %v321
        %v323 = vsel %vm312, %v309, 0.0
        %v324 = vadd.f32 %v322, %v323
        %v325 = vsel %vm312, %v311, 0.0
        %v326 = vadd.f32 %v324, %v325
        %v327 = vmul.f32 %v319, %v294
        %v328 = vmul.f32 %v326, %v295
        %v329 = vsel %vm312, %v327, 0.0
        %v330 = vsel %vm312, %v328, 0.0
        %v331 = vadd.f32 %v329, %v330
        %332 = vadd.xlane.f32.xlu0 %v331
        %v333 = vpop.xlane.xlu0 %332
        %v334 = vrot.slane %v333, 4
        %v335 = vadd.f32 %v333, %v334
        %v336 = vrot.slane %v335, 2
        %v337 = vadd.f32 %v335, %v336
        %v338 = vrot.slane %v337, 1
        %v339 = vadd.f32 %v337, %v338
        %s340 = vtos %v339
        %v341 = vsel %vm312, %v319, 0.0
        %v342 = vsel %vm312, %v326, 0.0
        %v343 = vadd.f32 %v341, %v342
        %344 = vadd.xlane.f32.xlu0 %v343
        %v345 = vpop.xlane.xlu0 %344
        %v346 = vrot.slane %v345, 4
        %v347 = vadd.f32 %v345, %v346
        %v348 = vrot.slane %v347, 2
        %v349 = vadd.f32 %v347, %v348
        %v350 = vrot.slane %v349, 1
        %v351 = vadd.f32 %v349, %v350
        %s352 = vtos %v351
        %v353 = vlaneseq
        %v354 = vand.u32 %v353, 127
        %v355 = vlaneseq
        %v356 = vshrl.u32 %v355, 7
        %v357 = vadd.s32 %v356, 8
        %vm358 = vcmp.lt.s32.totalorder %v354, 15
        %v359 = vsel %vm358, 1, 0
        %v360 = vcvt.s32.f32 %v359
        %vm361 = vcmp.gt.s32.totalorder %v356, 0
        %vm362 = vcmp.gt.s32.totalorder %v357, 0
        %v363 = vsel %vm361, 1, 0
        %v364 = vsel %vm362, 1, 0
        %v365 = vcvt.s32.f32 %v363
        %v366 = vcvt.s32.f32 %v364
        %vm367 = vcmask 1047680
        %368 = vrot.lane.b32.xlu0 %v294, 16
        %v369 = vpop.permute.xlu0 %368
        %v370 = vsel %vm367, %v369, %v294
        %371 = vrot.lane.b32.xlu0 %v295, 16
        %v372 = vpop.permute.xlu0 %371
        %v373 = vsel %vm367, %v372, %v295
        %374 = vrot.lane.b32.xlu0 %v370, 16
        %v375 = vpop.permute.xlu0 %374
        %376 = vrot.lane.b32.xlu0 %v373, 16
        %v377 = vpop.permute.xlu0 %376
        %v378 = vsel %vm367, %v375, %v294
        %v379 = vsel %vm367, %v377, %v295
        %382 = vrot.lane.b32.xlu0 %v294, 1
        %v383 = vpop.permute.xlu0 %382
        %384 = vrot.lane.b32.xlu0 %v295, 1
        %v385 = vpop.permute.xlu0 %384
        %v388 = vsub.f32 %v378, %v383
        %v389 = vsub.f32 %v379, %v385
        %v390 = vand.u32 2147483647, %v388
        %v391 = vand.u32 2147483647, %v389
        %393 = vrot.lane.b32.xlu0 %v360, 1
        %v394 = vpop.permute.xlu0 %393
        %v396 = vmul.f32 %v390, %v394
        %v397 = vmul.f32 %v391, %v394
        %v398 = vrot.slane %v294, 7
        %v399 = vrot.slane %v295, 7
        %vm400 = vcmp.lt.s32.totalorder %v356, 1
        %v401 = vsel %vm400, %v398, %v399
        %v402 = vsel %vm400, %v399, %v398
        %v403 = vsub.f32 %v294, %v402
        %v404 = vsub.f32 %v295, %v401
        %v405 = vand.u32 2147483647, %v403
        %v406 = vand.u32 2147483647, %v404
        %v407 = vmul.f32 %v405, %v365
        %v408 = vmul.f32 %v406, %v366
        %411 = vrot.lane.b32.xlu0 %v407, 1
        %v412 = vpop.permute.xlu0 %411
        %413 = vrot.lane.b32.xlu0 %v408, 1
        %v414 = vpop.permute.xlu0 %413
        %v417 = vadd.f32 %v396, %v412
        %v418 = vadd.f32 %v397, %v414
        %v419 = vmax.f32 %v417, 0.0
        %v420 = vmax.f32 %v418, 0.0
        %v421 = vmin.f32 %v419, 1.0
        %v422 = vmin.f32 %v420, 1.0
        %425 = vrot.lane.b32.xlu0 %v421, 127
        %v426 = vpop.permute.xlu0 %425
        %427 = vrot.lane.b32.xlu0 %v422, 127
        %v428 = vpop.permute.xlu0 %427
        %v431 = vsel %vm312, %v426, 0.0
        %v432 = vsel %vm312, %v428, 0.0
        %v433 = vadd.f32 %v431, %v432
        %434 = vadd.xlane.f32.xlu0 %v433
        %v435 = vpop.xlane.xlu0 %434
        %v436 = vrot.slane %v435, 4
        %v437 = vadd.f32 %v435, %v436
        %v438 = vrot.slane %v437, 2
        %v439 = vadd.f32 %v437, %v438
        %v440 = vrot.slane %v439, 1
        %v441 = vadd.f32 %v439, %v440
        %s442 = vtos %v441
        %443 = vrot.lane.b32.xlu0 %v272, 16
        %v444 = vpop.permute.xlu0 %443
        %v445 = vsel %vm367, %v444, %v272
        %446 = vrot.lane.b32.xlu0 %v273, 16
        %v447 = vpop.permute.xlu0 %446
        %v448 = vsel %vm367, %v447, %v273
        %449 = vrot.lane.b32.xlu0 %v274, 16
        %v450 = vpop.permute.xlu0 %449
        %v451 = vsel %vm367, %v450, %v274
        %452 = vrot.lane.b32.xlu0 %v275, 16
        %v453 = vpop.permute.xlu0 %452
        %v454 = vsel %vm367, %v453, %v275
        %455 = vrot.lane.b32.xlu0 %v276, 16
        %v456 = vpop.permute.xlu0 %455
        %v457 = vsel %vm367, %v456, %v276
        %458 = vrot.lane.b32.xlu0 %v277, 16
        %v459 = vpop.permute.xlu0 %458
        %v460 = vsel %vm367, %v459, %v277
        %461 = vrot.lane.b32.xlu0 %v278, 16
        %v462 = vpop.permute.xlu0 %461
        %v463 = vsel %vm367, %v462, %v278
        %464 = vrot.lane.b32.xlu0 %v279, 16
        %v465 = vpop.permute.xlu0 %464
        %v466 = vsel %vm367, %v465, %v279
        %467 = vrot.lane.b32.xlu0 %v445, 16
        %v468 = vpop.permute.xlu0 %467
        %469 = vrot.lane.b32.xlu0 %v448, 16
        %v470 = vpop.permute.xlu0 %469
        %471 = vrot.lane.b32.xlu0 %v451, 16
        %v472 = vpop.permute.xlu0 %471
        %473 = vrot.lane.b32.xlu0 %v454, 16
        %v474 = vpop.permute.xlu0 %473
        %475 = vrot.lane.b32.xlu0 %v457, 16
        %v476 = vpop.permute.xlu0 %475
        %477 = vrot.lane.b32.xlu0 %v460, 16
        %v478 = vpop.permute.xlu0 %477
        %479 = vrot.lane.b32.xlu0 %v463, 16
        %v480 = vpop.permute.xlu0 %479
        %481 = vrot.lane.b32.xlu0 %v466, 16
        %v482 = vpop.permute.xlu0 %481
        %v483 = vsel %vm367, %v468, %v272
        %v484 = vsel %vm367, %v470, %v273
        %v485 = vsel %vm367, %v472, %v274
        %v486 = vsel %vm367, %v474, %v275
        %v487 = vsel %vm367, %v476, %v276
        %v488 = vsel %vm367, %v478, %v277
        %v489 = vsel %vm367, %v480, %v278
        %v490 = vsel %vm367, %v482, %v279
        %499 = vrot.lane.b32.xlu0 %v272, 1
        %v500 = vpop.permute.xlu0 %499
        %501 = vrot.lane.b32.xlu0 %v273, 1
        %v502 = vpop.permute.xlu0 %501
        %503 = vrot.lane.b32.xlu0 %v274, 1
        %v504 = vpop.permute.xlu0 %503
        %505 = vrot.lane.b32.xlu0 %v275, 1
        %v506 = vpop.permute.xlu0 %505
        %507 = vrot.lane.b32.xlu0 %v276, 1
        %v508 = vpop.permute.xlu0 %507
        %509 = vrot.lane.b32.xlu0 %v277, 1
        %v510 = vpop.permute.xlu0 %509
        %511 = vrot.lane.b32.xlu0 %v278, 1
        %v512 = vpop.permute.xlu0 %511
        %513 = vrot.lane.b32.xlu0 %v279, 1
        %v514 = vpop.permute.xlu0 %513
        %v523 = vsub.f32 %v483, %v500
        %v524 = vsub.f32 %v484, %v502
        %v525 = vsub.f32 %v485, %v504
        %v526 = vsub.f32 %v486, %v506
        %v527 = vsub.f32 %v487, %v508
        %v528 = vsub.f32 %v488, %v510
        %v529 = vsub.f32 %v489, %v512
        %v530 = vsub.f32 %v490, %v514
        %v531 = vand.u32 2147483647, %v523
        %v532 = vand.u32 2147483647, %v524
        %v533 = vand.u32 2147483647, %v525
        %v534 = vand.u32 2147483647, %v526
        %v535 = vand.u32 2147483647, %v527
        %v536 = vand.u32 2147483647, %v528
        %v537 = vand.u32 2147483647, %v529
        %v538 = vand.u32 2147483647, %v530
        %539 = vrot.lane.b32.xlu0 %v280, 16
        %v540 = vpop.permute.xlu0 %539
        %v541 = vsel %vm367, %v540, %v280
        %542 = vrot.lane.b32.xlu0 %v281, 16
        %v543 = vpop.permute.xlu0 %542
        %v544 = vsel %vm367, %v543, %v281
        %545 = vrot.lane.b32.xlu0 %v282, 16
        %v546 = vpop.permute.xlu0 %545
        %v547 = vsel %vm367, %v546, %v282
        %548 = vrot.lane.b32.xlu0 %v283, 16
        %v549 = vpop.permute.xlu0 %548
        %v550 = vsel %vm367, %v549, %v283
        %551 = vrot.lane.b32.xlu0 %v284, 16
        %v552 = vpop.permute.xlu0 %551
        %v553 = vsel %vm367, %v552, %v284
        %554 = vrot.lane.b32.xlu0 %v285, 16
        %v555 = vpop.permute.xlu0 %554
        %v556 = vsel %vm367, %v555, %v285
        %557 = vrot.lane.b32.xlu0 %v286, 16
        %v558 = vpop.permute.xlu0 %557
        %v559 = vsel %vm367, %v558, %v286
        %560 = vrot.lane.b32.xlu0 %v287, 16
        %v561 = vpop.permute.xlu0 %560
        %v562 = vsel %vm367, %v561, %v287
        %563 = vrot.lane.b32.xlu0 %v541, 16
        %v564 = vpop.permute.xlu0 %563
        %565 = vrot.lane.b32.xlu0 %v544, 16
        %v566 = vpop.permute.xlu0 %565
        %567 = vrot.lane.b32.xlu0 %v547, 16
        %v568 = vpop.permute.xlu0 %567
        %569 = vrot.lane.b32.xlu0 %v550, 16
        %v570 = vpop.permute.xlu0 %569
        %571 = vrot.lane.b32.xlu0 %v553, 16
        %v572 = vpop.permute.xlu0 %571
        %573 = vrot.lane.b32.xlu0 %v556, 16
        %v574 = vpop.permute.xlu0 %573
        %575 = vrot.lane.b32.xlu0 %v559, 16
        %v576 = vpop.permute.xlu0 %575
        %577 = vrot.lane.b32.xlu0 %v562, 16
        %v578 = vpop.permute.xlu0 %577
        %v579 = vsel %vm367, %v564, %v280
        %v580 = vsel %vm367, %v566, %v281
        %v581 = vsel %vm367, %v568, %v282
        %v582 = vsel %vm367, %v570, %v283
        %v583 = vsel %vm367, %v572, %v284
        %v584 = vsel %vm367, %v574, %v285
        %v585 = vsel %vm367, %v576, %v286
        %v586 = vsel %vm367, %v578, %v287
        %595 = vrot.lane.b32.xlu0 %v280, 1
        %v596 = vpop.permute.xlu0 %595
        %597 = vrot.lane.b32.xlu0 %v281, 1
        %v598 = vpop.permute.xlu0 %597
        %599 = vrot.lane.b32.xlu0 %v282, 1
        %v600 = vpop.permute.xlu0 %599
        %601 = vrot.lane.b32.xlu0 %v283, 1
        %v602 = vpop.permute.xlu0 %601
        %603 = vrot.lane.b32.xlu0 %v284, 1
        %v604 = vpop.permute.xlu0 %603
        %605 = vrot.lane.b32.xlu0 %v285, 1
        %v606 = vpop.permute.xlu0 %605
        %607 = vrot.lane.b32.xlu0 %v286, 1
        %v608 = vpop.permute.xlu0 %607
        %609 = vrot.lane.b32.xlu0 %v287, 1
        %v610 = vpop.permute.xlu0 %609
        %v619 = vsub.f32 %v579, %v596
        %v620 = vsub.f32 %v580, %v598
        %v621 = vsub.f32 %v581, %v600
        %v622 = vsub.f32 %v582, %v602
        %v623 = vsub.f32 %v583, %v604
        %v624 = vsub.f32 %v584, %v606
        %v625 = vsub.f32 %v585, %v608
        %v626 = vsub.f32 %v586, %v610
        %v627 = vand.u32 2147483647, %v619
        %v628 = vand.u32 2147483647, %v620
        %v629 = vand.u32 2147483647, %v621
        %v630 = vand.u32 2147483647, %v622
        %v631 = vand.u32 2147483647, %v623
        %v632 = vand.u32 2147483647, %v624
        %v633 = vand.u32 2147483647, %v625
        %v634 = vand.u32 2147483647, %v626
        %v635 = vsub.f32 %v531, %v627
        %v636 = vsub.f32 %v532, %v628
        %v637 = vsub.f32 %v533, %v629
        %v638 = vsub.f32 %v534, %v630
        %v639 = vsub.f32 %v535, %v631
        %v640 = vsub.f32 %v536, %v632
        %v641 = vsub.f32 %v537, %v633
        %v642 = vsub.f32 %v538, %v634
        %v643 = vrot.slane %v272, 7
        %v644 = vrot.slane %v274, 7
        %v645 = vrot.slane %v276, 7
        %v646 = vrot.slane %v278, 7
        %v647 = vrot.slane %v273, 7
        %v648 = vrot.slane %v275, 7
        %v649 = vrot.slane %v277, 7
        %v650 = vrot.slane %v279, 7
        %v651 = vsel %vm400, %v643, %v647
        %v652 = vsel %vm400, %v644, %v648
        %v653 = vsel %vm400, %v645, %v649
        %v654 = vsel %vm400, %v646, %v650
        %v655 = vsel %vm400, %v647, %v643
        %v656 = vsel %vm400, %v648, %v644
        %v657 = vsel %vm400, %v649, %v645
        %v658 = vsel %vm400, %v650, %v646
        %v659 = vsub.f32 %v272, %v655
        %v660 = vsub.f32 %v273, %v651
        %v661 = vsub.f32 %v274, %v656
        %v662 = vsub.f32 %v275, %v652
        %v663 = vsub.f32 %v276, %v657
        %v664 = vsub.f32 %v277, %v653
        %v665 = vsub.f32 %v278, %v658
        %v666 = vsub.f32 %v279, %v654
        %v667 = vand.u32 2147483647, %v659
        %v668 = vand.u32 2147483647, %v660
        %v669 = vand.u32 2147483647, %v661
        %v670 = vand.u32 2147483647, %v662
        %v671 = vand.u32 2147483647, %v663
        %v672 = vand.u32 2147483647, %v664
        %v673 = vand.u32 2147483647, %v665
        %v674 = vand.u32 2147483647, %v666
        %v675 = vrot.slane %v280, 7
        %v676 = vrot.slane %v282, 7
        %v677 = vrot.slane %v284, 7
        %v678 = vrot.slane %v286, 7
        %v679 = vrot.slane %v281, 7
        %v680 = vrot.slane %v283, 7
        %v681 = vrot.slane %v285, 7
        %v682 = vrot.slane %v287, 7
        %v683 = vsel %vm400, %v675, %v679
        %v684 = vsel %vm400, %v676, %v680
        %v685 = vsel %vm400, %v677, %v681
        %v686 = vsel %vm400, %v678, %v682
        %v687 = vsel %vm400, %v679, %v675
        %v688 = vsel %vm400, %v680, %v676
        %v689 = vsel %vm400, %v681, %v677
        %v690 = vsel %vm400, %v682, %v678
        %v691 = vsub.f32 %v280, %v687
        %v692 = vsub.f32 %v281, %v683
        %v693 = vsub.f32 %v282, %v688
        %v694 = vsub.f32 %v283, %v684
        %v695 = vsub.f32 %v284, %v689
        %v696 = vsub.f32 %v285, %v685
        %v697 = vsub.f32 %v286, %v690
        %v698 = vsub.f32 %v287, %v686
        %v699 = vand.u32 2147483647, %v691
        %v700 = vand.u32 2147483647, %v692
        %v701 = vand.u32 2147483647, %v693
        %v702 = vand.u32 2147483647, %v694
        %v703 = vand.u32 2147483647, %v695
        %v704 = vand.u32 2147483647, %v696
        %v705 = vand.u32 2147483647, %v697
        %v706 = vand.u32 2147483647, %v698
        %v707 = vsub.f32 %v667, %v699
        %v708 = vsub.f32 %v668, %v700
        %v709 = vsub.f32 %v669, %v701
        %v710 = vsub.f32 %v670, %v702
        %v711 = vsub.f32 %v671, %v703
        %v712 = vsub.f32 %v672, %v704
        %v713 = vsub.f32 %v673, %v705
        %v714 = vsub.f32 %v674, %v706
        %v715 = vmul.f32 %v635, %v635
        %v716 = vmul.f32 %v636, %v636
        %v717 = vmul.f32 %v637, %v637
        %v718 = vmul.f32 %v638, %v638
        %v719 = vmul.f32 %v639, %v639
        %v720 = vmul.f32 %v640, %v640
        %v721 = vmul.f32 %v641, %v641
        %v722 = vmul.f32 %v642, %v642
        %vm723 = vcmask 138248
        %v724 = vsel %vm723, %v715, 0.0
        %v725 = vsel %vm723, %v717, 0.0
        %v726 = vadd.f32 %v724, %v725
        %v727 = vsel %vm723, %v719, 0.0
        %v728 = vadd.f32 %v726, %v727
        %v729 = vsel %vm723, %v721, 0.0
        %v730 = vadd.f32 %v728, %v729
        %v731 = vsel %vm723, %v716, 0.0
        %v732 = vsel %vm723, %v718, 0.0
        %v733 = vadd.f32 %v731, %v732
        %v734 = vsel %vm723, %v720, 0.0
        %v735 = vadd.f32 %v733, %v734
        %v736 = vsel %vm723, %v722, 0.0
        %v737 = vadd.f32 %v735, %v736
        %v738 = vmul.f32 %v707, %v707
        %v739 = vmul.f32 %v708, %v708
        %v740 = vmul.f32 %v709, %v709
        %v741 = vmul.f32 %v710, %v710
        %v742 = vmul.f32 %v711, %v711
        %v743 = vmul.f32 %v712, %v712
        %v744 = vmul.f32 %v713, %v713
        %v745 = vmul.f32 %v714, %v714
        %v746 = vsel %vm312, %v738, 0.0
        %v747 = vsel %vm312, %v740, 0.0
        %v748 = vadd.f32 %v746, %v747
        %v749 = vsel %vm312, %v742, 0.0
        %v750 = vadd.f32 %v748, %v749
        %v751 = vsel %vm312, %v744, 0.0
        %v752 = vadd.f32 %v750, %v751
        %v753 = vsel %vm312, %v739, 0.0
        %v754 = vsel %vm312, %v741, 0.0
        %v755 = vadd.f32 %v753, %v754
        %v756 = vsel %vm312, %v743, 0.0
        %v757 = vadd.f32 %v755, %v756
        %v758 = vsel %vm312, %v745, 0.0
        %v759 = vadd.f32 %v757, %v758
        %v760 = vmul.f32 %v421, %v421
        %v761 = vmul.f32 %v422, %v422
        %v762 = vmul.f32 %v760, %v394
        %v763 = vmul.f32 %v761, %v394
        %v764 = vmul.f32 %v730, %v762
        %v765 = vmul.f32 %v737, %v763
        %v766 = vmul.f32 %v760, %v365
        %v767 = vmul.f32 %v761, %v366
        %770 = vrot.lane.b32.xlu0 %v766, 127
        %v771 = vpop.permute.xlu0 %770
        %772 = vrot.lane.b32.xlu0 %v767, 127
        %v773 = vpop.permute.xlu0 %772
        %v776 = vmul.f32 %v752, %v771
        %v777 = vmul.f32 %v759, %v773
        %780 = vrot.lane.b32.xlu0 %v776, 1
        %v781 = vpop.permute.xlu0 %780
        %782 = vrot.lane.b32.xlu0 %v777, 1
        %v783 = vpop.permute.xlu0 %782
        %v786 = vadd.f32 %v764, %v781
        %v787 = vadd.f32 %v765, %v783
        %790 = vrot.lane.b32.xlu0 %v786, 127
        %v791 = vpop.permute.xlu0 %790
        %792 = vrot.lane.b32.xlu0 %v787, 127
        %v793 = vpop.permute.xlu0 %792
        %v796 = vsel %vm312, %v791, 0.0
        %v797 = vsel %vm312, %v793, 0.0
        %v798 = vadd.f32 %v796, %v797
        %799 = vadd.xlane.f32.xlu0 %v798
        %v800 = vpop.xlane.xlu0 %799
        %v801 = vrot.slane %v800, 4
        %v802 = vadd.f32 %v800, %v801
        %v803 = vrot.slane %v802, 2
        %v804 = vadd.f32 %v802, %v803
        %v805 = vrot.slane %v804, 1
        %v806 = vadd.f32 %v804, %v805
        %s807 = vtos %v806
        %vm808 = vcmp.eq.s32.totalorder %v356, 0
        %v809 = vstv %s340
        %v810 = vsel %vm808, %v809, 0.0
        %vm811 = vcmp.eq.s32.totalorder %v356, 1
        %v812 = vstv %s352
        %v813 = vsel %vm811, %v812, 0.0
        %v814 = vadd.f32 %v810, %v813
        %vm815 = vcmp.eq.s32.totalorder %v356, 2
        %v816 = vstv %s807
        %v817 = vsel %vm815, %v816, 0.0
        %v818 = vadd.f32 %v814, %v817
        %vm819 = vcmp.eq.s32.totalorder %v356, 3
        %v820 = vstv %s442
        %v821 = vsel %vm819, %v820, 0.0
        %v822 = vadd.f32 %v818, %v821
        %823 = vst [vmem:[%s271] sm:$0xff] %v822
        %s824 = sand.u32 %s109, 1
        %s825 = scalar_lea.sflag [#allocation4], %s824
        %s826 = sand.u32 %s109, 1
        %s827 = smul.addr %s826, 8
        %s828 = scalar_lea.vmem [#allocation8], %s827
        // Predicated region
        $region45: #{tpu_custom_call.1} parent=31 // pred_check
          %p829 = pneg %p119
        $region46: #{tpu_custom_call.1} parent=31 // pred_check_branch
          %831 = sbr.rel (%p829) target = $region48
        $region47: #{tpu_custom_call.1} parent=31 // pred_region
          %833 = vsyncadd %s825, 0
          %s834 = smul.addr %s23, 8
          %s835 = scalar_lea.hbm %s3, %s834
          %s837 = sshll.u32 %s828, 4
          %s838 = int_to_ptr.vmem [resolvable:$true] %s837
          %s839 = sshll.u32 %s835, 4
          %s840 = int_to_ptr.hbm [resolvable:$true] %s839
          %842 = dma.vmem_to_hbm [thread:$0]  %s838, 128, %s840, %s825
        $region48: #{tpu_custom_call.1} parent=31 // pred_fallthru
          _
      $region32: #{tpu_custom_call.1} parent=5 // pred_fallthru
        _
      %p843 = scmp.le.s32.totalorder 2, %s18
      // Predicated region
      $region49: #{tpu_custom_call.1} parent=5 // pred_check
        %p844 = pneg %p843
      $region50: #{tpu_custom_call.1} parent=5 // pred_check_branch
        %846 = sbr.rel (%p844) target = $region52
      $region51: #{tpu_custom_call.1} parent=5 // pred_region
        %s847 = ssub.s32 %s18, 2
        // Predicated region
        $region53: #{tpu_custom_call.1} parent=51 // pred_check
          %p848 = pneg %p125
        $region54: #{tpu_custom_call.1} parent=51 // pred_check_branch
          %850 = sbr.rel (%p848) target = $region56
        $region55: #{tpu_custom_call.1} parent=51 // pred_region
          %s851 = sand.u32 %s110, 1
          %s852 = scalar_lea.sflag [#allocation4], %s851
          %s853 = sand.u32 %s110, 1
          %s854 = smul.addr %s853, 8
          %s855 = scalar_lea.vmem [#allocation8], %s854
          %857 = dma.done %s852, 128
        $region56: #{tpu_custom_call.1} parent=51 // pred_fallthru
          _
      $region52: #{tpu_custom_call.1} parent=5 // pred_fallthru
        _
    $region6: #{tpu_custom_call.1} parent=1 // loop_footer
      %s22 = sadd.s32 1, %s18
    $region7: #{tpu_custom_call.1} parent=1 // loop_footer_branch
      %17 = sbr.rel target = $region3
    $region8: #{tpu_custom_call.1} parent=1 // loop_exit
      _
    %858 = vsyncpa [#allocation3], 1
    %s859 = scalar_lea.sflag [#allocation3], 1
    %860 = vsyncpa %s859, 1
    %861 = vsyncpa [#allocation6], 1
    %s862 = scalar_lea.sflag [#allocation6], 1
    %863 = vsyncpa %s862, 1
    %864 = vsyncpa [#allocation4], 1
    %s865 = scalar_lea.sflag [#allocation4], 1
    %866 = vsyncpa %s865, 1

</llo_original>
